<compile_context>
chip_gen: v6e
topology: v6e:2x2x1
jax: 0.10.0
libtpu: 0.0.40
codegen_flags: <defaults>
</compile_context>

<pallas_src>
import functools

import jax
import jax.numpy as jnp
from jax import lax
from jax.experimental import pallas as pl
from jax.experimental.pallas import tpu as pltpu

BN_EPS = 1e-4
_MXU_MIN_CIN = 32          # below this, the 1x1 conv runs on the VPU (outer-product FMA)


def _vmem_limit_bytes():
    """Generation-aware scoped-VMEM request: ~3/4 of physical, capped; safe fallback."""
    try:
        cap = int(pltpu.get_tpu_info().vmem_capacity_bytes)
    except Exception:
        cap = 0
    if cap <= 0:
        return 32 * 1024 * 1024                       # known-safe default on every generation
    return min((cap * 3) // 4, 96 * 1024 * 1024)      # v7x(64MiB)->48MiB, v5e/v6e(128MiB)->96MiB


def _pick_hw_tile(hw, c_in, c_out, budget_bytes):
    """Largest multiple-of-128 divisor of HW whose pass-2 working set fits budget_bytes."""
    if hw % 128 != 0:
        return hw                                     # block == full array dim (always legal)
    # f32 bytes per lane column of T:
    #   x (double-buffered) 2*C, noise (double-buffered) 2*C, out (double-buffered) 2*C_out,
    #   in-kernel intermediates y/bn/|bn|/s ~ 4*C, f32 accumulator C_out.
    bytes_per_lane = 4 * (8 * c_in + 3 * c_out)
    t_max = max(128, (budget_bytes // bytes_per_lane) // 128 * 128)
    t = max(128, (min(hw, t_max) // 128) * 128)
    while hw % t:
        t -= 128
    return t


# ---------------------------------------------------------------------------
# Pass 1: per-(HW-tile) partial per-channel sums, accumulated over the batch axis
# ---------------------------------------------------------------------------
def _bn_stats_kernel(x_ref, noise_ref, sum_ref, sumsq_ref):
    n = pl.program_id(1)                               # inner (batch) axis -- serial/"arbitrary"
    y = x_ref[...] + noise_ref[...]                    # (C, T) f32
    s = jnp.sum(y, axis=1, keepdims=True)              # (C, 1)
    sq = jnp.sum(y * y, axis=1, keepdims=True)         # (C, 1)

    @pl.when(n == 0)
    def _():
        sum_ref[...] = s
        sumsq_ref[...] = sq

    @pl.when(n != 0)
    def _():
        sum_ref[...] = sum_ref[...] + s
        sumsq_ref[...] = sumsq_ref[...] + sq


# ---------------------------------------------------------------------------
# Pass 2: fused noise-add + BN-apply + sign + channel-mean + 1x1 conv + ReLU
# ---------------------------------------------------------------------------
def _noise_binconv_kernel(x_ref, noise_ref, a_ref, b_ref, w_ref, o_ref, *, use_mxu):
    y = x_ref[...] + noise_ref[...]                    # (C_in, T) f32
    bn = a_ref[...] * y + b_ref[...]                   # folded BN
    K = jnp.mean(jnp.abs(bn), axis=0, keepdims=True)   # (1, T) == conv2d(A, 1x1 ones)
    s = jnp.sign(bn)                                   # BinActive forward (0 stays 0)

    if use_mxu:
        # Weight already bf16 (cast once in the wrapper); sign is exact in bf16.
        out = jnp.dot(w_ref[...], s.astype(jnp.bfloat16),
                      preferred_element_type=jnp.float32)         # (C_out, T)
    else:
        # Small C_in: unrolled outer-product accumulation on the VPU, all f32, exact.
        w = w_ref[...]                                            # (C_out, C_in) f32
        c_in = s.shape[0]
        out = w[:, 0:1] * s[0:1, :]
        for c in range(1, c_in):
            out = out + w[:, c:c + 1] * s[c:c + 1, :]

    o_ref[...] = jnp.maximum(out * K, 0.0).astype(o_ref.dtype)


def noise_layer_forward(x, noise, gamma, beta, w):
    """x: (N, C_in, H, W) f32; noise: (C_in, H, W); gamma/beta: (C_in,); w: (C_out, C_in)."""
    N, C, H, W = x.shape
    C_out = w.shape[0]
    HW = H * W
    NHW = N * HW

    # Free reshapes only -- no transposes, no materialized batch-broadcast of the noise.
    x3 = x.reshape(N, C, HW)
    n2 = noise.reshape(C, HW)

    vmem_limit = _vmem_limit_bytes()
    T = _pick_hw_tile(HW, C, C_out, budget_bytes=vmem_limit // 2)
    ntb = HW // T
    # HW-tile outer, batch inner: the noise tile index is constant across the inner axis, so it
    # stays resident in VMEM instead of being re-fetched for every batch element.
    grid = (ntb, N)

    # --- pass 1: per-tile partial sums (outer axis parallel -> uses both v7x cores) ---
    psum, psumsq = pl.pallas_call(
        _bn_stats_kernel,
        out_shape=(jax.ShapeDtypeStruct((ntb, C, 1), jnp.float32),
                   jax.ShapeDtypeStruct((ntb, C, 1), jnp.float32)),
        grid=grid,
        in_specs=[
            pl.BlockSpec((None, C, T), lambda t, n: (n, 0, t)),   # x tile
            pl.BlockSpec((C, T), lambda t, n: (0, t)),            # noise tile (resident over n)
        ],
        out_specs=(
            pl.BlockSpec((None, C, 1), lambda t, n: (t, 0, 0)),   # partial sum(y)
            pl.BlockSpec((None, C, 1), lambda t, n: (t, 0, 0)),   # partial sum(y^2)
        ),
        compiler_params=pltpu.CompilerParams(
            dimension_semantics=("parallel", "arbitrary"),
            vmem_limit_bytes=vmem_limit),
    )(x3, n2)

    # Fold stats -> BN scale/offset (tiny (C,) math, plain JAX).
    mu = jnp.sum(psum[:, :, 0], axis=0) / NHW
    var = jnp.maximum(jnp.sum(psumsq[:, :, 0], axis=0) / NHW - mu * mu, 0.0)
    a = gamma.astype(jnp.float32) * lax.rsqrt(var + BN_EPS)
    b = beta.astype(jnp.float32) - mu * a
    a2 = a.reshape(C, 1)
    b2 = b.reshape(C, 1)

    use_mxu = C >= _MXU_MIN_CIN
    w2 = w.astype(jnp.bfloat16) if use_mxu else w.astype(jnp.float32)   # cast ONCE, in wrapper

    # --- pass 2: tiled, pipelined main kernel (both grid axes independent -> "parallel") ---
    out3 = pl.pallas_call(
        functools.partial(_noise_binconv_kernel, use_mxu=use_mxu),
        out_shape=jax.ShapeDtypeStruct((N, C_out, HW), x.dtype),
        grid=grid,
        in_specs=[
            pl.BlockSpec((None, C, T), lambda t, n: (n, 0, t)),   # x tile
            pl.BlockSpec((C, T), lambda t, n: (0, t)),            # noise tile (resident over n)
            pl.BlockSpec((C, 1), lambda t, n: (0, 0)),            # folded BN scale a
            pl.BlockSpec((C, 1), lambda t, n: (0, 0)),            # folded BN offset b
            pl.BlockSpec((C_out, C), lambda t, n: (0, 0)),        # 1x1 conv weight (resident)
        ],
        out_specs=pl.BlockSpec((None, C_out, T), lambda t, n: (n, 0, t)),
        compiler_params=pltpu.CompilerParams(
            dimension_semantics=("parallel", "parallel"),
            vmem_limit_bytes=vmem_limit),
    )(x3, n2, a2, b2, w2)

    return out3.reshape(N, C_out, H, W)


def reference_forward(x, noise, gamma, beta, w):
    """Pure-JAX reference of the PyTorch module's forward (training-mode BN, drop_ratio=0)."""
    y = x + noise[None]
    mu = jnp.mean(y, axis=(0, 2, 3), keepdims=True)
    var = jnp.mean((y - mu) ** 2, axis=(0, 2, 3), keepdims=True)
    bn = (gamma[None, :, None, None] * (y - mu) * lax.rsqrt(var + BN_EPS)
          + beta[None, :, None, None])
    A = jnp.mean(jnp.abs(bn), axis=1, keepdims=True)     # K == A for kernel_size=1
    s = jnp.sign(bn)
    out = jnp.einsum("oc,nchw->nohw", w, s)
    return jnp.maximum(out * A, 0.0)


if __name__ == "__main__":
    N, C_in, C_out, H, W = 2, 4, 8, 16, 16
    level = 0.1

    key = jax.random.PRNGKey(0)
    kx, kn, kg, kb, kw = jax.random.split(key, 5)

    x = jax.random.normal(kx, (N, C_in, H, W), dtype=jnp.float32)
    # NoiseLayer noise: shaped like x[0], uniform [0,1) -> (2u-1)*level, fixed thereafter.
    noise = (2.0 * jax.random.uniform(kn, (C_in, H, W), dtype=jnp.float32) - 1.0) * level
    # BatchNorm affine params (deterministic synthetic init).
    gamma = 1.0 + 0.1 * jax.random.normal(kg, (C_in,), dtype=jnp.float32)
    beta = 0.1 * jax.random.normal(kb, (C_in,), dtype=jnp.float32)
    # 1x1 conv weight (C_out, C_in, 1, 1) -> (C_out, C_in), no bias.
    bound = 1.0 / jnp.sqrt(jnp.float32(C_in))
    w = jax.random.uniform(kw, (C_out, C_in), dtype=jnp.float32, minval=-bound, maxval=bound)

    out = jax.block_until_ready(noise_layer_forward(x, noise, gamma, beta, w))
    assert out.shape == (N, C_out, H, W), out.shape

    # Small-C path keeps everything in f32, so the kernel matches the module reference tightly.
    ref = reference_forward(x, noise, gamma, beta, w)
    err = float(jnp.max(jnp.abs(out - ref)))
    assert jnp.allclose(out, ref, atol=1e-4, rtol=1e-4), err

    # TODO(synk): BinActive backward (straight-through clamp) and BN running-stat updates are
    # training-time state, not part of this forward kernel.
    print("KERNEL_OK")
</pallas_src>

<mosaic_0001>
module attributes {stable_mosaic.version = 11 : i64} {
  func.func @_bn_stats_kernel(%arg0: i32, %arg1: i32, %arg2: memref<1x4x256xf32, #tpu.memory_space<vmem>>, %arg3: memref<4x256xf32, #tpu.memory_space<vmem>>, %arg4: memref<1x4x1xf32, #tpu.memory_space<vmem>>, %arg5: memref<1x4x1xf32, #tpu.memory_space<vmem>>) attributes {dimension_semantics = [#tpu.dimension_semantics<parallel>, #tpu.dimension_semantics<arbitrary>], iteration_bounds = array<i64: 1, 2>, scalar_prefetch = 0 : i64, scratch_operands = 0 : i64, tpu.core_type = #tpu.core_type<tc>, window_params = [{transform_indices = @transform_0, window_bounds = array<i64: 1, 4, 256>}, {transform_indices = @transform_1, window_bounds = array<i64: 4, 256>}, {transform_indices = @transform_2, window_bounds = array<i64: 1, 4, 1>}, {transform_indices = @transform_3, window_bounds = array<i64: 1, 4, 1>}]} {
    %c0 = arith.constant 0 : index
    %c0_0 = arith.constant 0 : index
    %c0_1 = arith.constant 0 : index
    %0 = vector.load %arg2[%c0, %c0_0, %c0_1] : memref<1x4x256xf32, #tpu.memory_space<vmem>>, vector<1x4x256xf32>
    %1 = vector.shape_cast %0 : vector<1x4x256xf32> to vector<4x256xf32>
    %c0_2 = arith.constant 0 : index
    %c0_3 = arith.constant 0 : index
    %2 = vector.load %arg3[%c0_2, %c0_3] : memref<4x256xf32, #tpu.memory_space<vmem>>, vector<4x256xf32>
    %3 = arith.addf %1, %2 : vector<4x256xf32>
    %cst = arith.constant dense<0.000000e+00> : vector<4xf32>
    %4 = vector.multi_reduction <add>, %3, %cst [1] : vector<4x256xf32> to vector<4xf32>
    %5 = vector.shape_cast %4 : vector<4xf32> to vector<4x1xf32>
    %6 = arith.mulf %3, %3 : vector<4x256xf32>
    %cst_4 = arith.constant dense<0.000000e+00> : vector<4xf32>
    %7 = vector.multi_reduction <add>, %6, %cst_4 [1] : vector<4x256xf32> to vector<4xf32>
    %8 = vector.shape_cast %7 : vector<4xf32> to vector<4x1xf32>
    %c0_i32 = arith.constant 0 : i32
    %9 = arith.cmpi eq, %arg1, %c0_i32 : i32
    %10 = arith.extui %9 : i1 to i32
    %c0_i32_5 = arith.constant 0 : i32
    %11 = arith.cmpi ne, %10, %c0_i32_5 : i32
    scf.if %11 {
      %c0_8 = arith.constant 0 : index
      %c0_9 = arith.constant 0 : index
      %c0_10 = arith.constant 0 : index
      %15 = vector.load %arg4[%c0_8, %c0_9, %c0_10] : memref<1x4x1xf32, #tpu.memory_space<vmem>>, vector<1x4x1xf32>
      %16 = vector.shape_cast %15 : vector<1x4x1xf32> to vector<4x1xf32>
      %17 = vector.shape_cast %5 : vector<4x1xf32> to vector<1x4x1xf32>
      tpu.vector_store %arg4[%c0_8, %c0_9, %c0_10], %17 {strides = array<i32>} : memref<1x4x1xf32, #tpu.memory_space<vmem>>, vector<1x4x1xf32>,
      %c0_11 = arith.constant 0 : index
      %c0_12 = arith.constant 0 : index
      %c0_13 = arith.constant 0 : index
      %18 = vector.load %arg5[%c0_11, %c0_12, %c0_13] : memref<1x4x1xf32, #tpu.memory_space<vmem>>, vector<1x4x1xf32>
      %19 = vector.shape_cast %18 : vector<1x4x1xf32> to vector<4x1xf32>
      %20 = vector.shape_cast %8 : vector<4x1xf32> to vector<1x4x1xf32>
      tpu.vector_store %arg5[%c0_11, %c0_12, %c0_13], %20 {strides = array<i32>} : memref<1x4x1xf32, #tpu.memory_space<vmem>>, vector<1x4x1xf32>,
    } else {
    }
    %c0_i32_6 = arith.constant 0 : i32
    %12 = arith.cmpi ne, %arg1, %c0_i32_6 : i32
    %13 = arith.extui %12 : i1 to i32
    %c0_i32_7 = arith.constant 0 : i32
    %14 = arith.cmpi ne, %13, %c0_i32_7 : i32
    scf.if %14 {
      %c0_8 = arith.constant 0 : index
      %c0_9 = arith.constant 0 : index
      %c0_10 = arith.constant 0 : index
      %15 = vector.load %arg4[%c0_8, %c0_9, %c0_10] : memref<1x4x1xf32, #tpu.memory_space<vmem>>, vector<1x4x1xf32>
      %16 = vector.shape_cast %15 : vector<1x4x1xf32> to vector<4x1xf32>
      %17 = arith.addf %16, %5 : vector<4x1xf32>
      %c0_11 = arith.constant 0 : index
      %c0_12 = arith.constant 0 : index
      %c0_13 = arith.constant 0 : index
      %18 = vector.load %arg4[%c0_11, %c0_12, %c0_13] : memref<1x4x1xf32, #tpu.memory_space<vmem>>, vector<1x4x1xf32>
      %19 = vector.shape_cast %18 : vector<1x4x1xf32> to vector<4x1xf32>
      %20 = vector.shape_cast %17 : vector<4x1xf32> to vector<1x4x1xf32>
      tpu.vector_store %arg4[%c0_11, %c0_12, %c0_13], %20 {strides = array<i32>} : memref<1x4x1xf32, #tpu.memory_space<vmem>>, vector<1x4x1xf32>,
      %c0_14 = arith.constant 0 : index
      %c0_15 = arith.constant 0 : index
      %c0_16 = arith.constant 0 : index
      %21 = vector.load %arg5[%c0_14, %c0_15, %c0_16] : memref<1x4x1xf32, #tpu.memory_space<vmem>>, vector<1x4x1xf32>
      %22 = vector.shape_cast %21 : vector<1x4x1xf32> to vector<4x1xf32>
      %23 = arith.addf %22, %8 : vector<4x1xf32>
      %c0_17 = arith.constant 0 : index
      %c0_18 = arith.constant 0 : index
      %c0_19 = arith.constant 0 : index
      %24 = vector.load %arg5[%c0_17, %c0_18, %c0_19] : memref<1x4x1xf32, #tpu.memory_space<vmem>>, vector<1x4x1xf32>
      %25 = vector.shape_cast %24 : vector<1x4x1xf32> to vector<4x1xf32>
      %26 = vector.shape_cast %23 : vector<4x1xf32> to vector<1x4x1xf32>
      tpu.vector_store %arg5[%c0_17, %c0_18, %c0_19], %26 {strides = array<i32>} : memref<1x4x1xf32, #tpu.memory_space<vmem>>, vector<1x4x1xf32>,
    } else {
    }
    return
  }
  func.func @transform_0(%arg0: i32, %arg1: i32) -> (i32, i32, i32) {
    %c0_i32 = arith.constant 0 : i32
    %c0_i32_0 = arith.constant 0 : i32
    return %arg1, %c0_i32, %arg0 : i32, i32, i32
  }
  func.func @transform_1(%arg0: i32, %arg1: i32) -> (i32, i32) {
    %c0_i32 = arith.constant 0 : i32
    %c0_i32_0 = arith.constant 0 : i32
    return %c0_i32, %arg0 : i32, i32
  }
  func.func @transform_2(%arg0: i32, %arg1: i32) -> (i32, i32, i32) {
    %c0_i32 = arith.constant 0 : i32
    %c0_i32_0 = arith.constant 0 : i32
    %c0_i32_1 = arith.constant 0 : i32
    return %arg0, %c0_i32, %c0_i32_0 : i32, i32, i32
  }
  func.func @transform_3(%arg0: i32, %arg1: i32) -> (i32, i32, i32) {
    %c0_i32 = arith.constant 0 : i32
    %c0_i32_0 = arith.constant 0 : i32
    %c0_i32_1 = arith.constant 0 : i32
    return %arg0, %c0_i32, %c0_i32_0 : i32, i32, i32
  }
}

</mosaic_0001>

<llo_original>
// kernel: tpu_custom_call.1
$region0: #{tpu_custom_call.1}
  #allocation0 [shape = 'u32[]', space=smem, size = 0x4, offset = 0x4, fixed_abs, tag = 'smem constant byte address 0x4 - core index']
  #allocation1 [shape = 'u32[144,128]{1,0:T(1,128)}', space=vmem, size = 0x12000, scoped, tag = 'internal scratch']
  %s0 = inlined_call_operand.hbm [shape: f32[2,4,256], index: 0, kind: input, shape index: {}]
  %s1 = inlined_call_operand.hbm [shape: f32[4,256], index: 1, kind: input, shape index: {}]
  %s2 = inlined_call_operand.vmem [shape: f32[1,4,1], index: 2, kind: output, shape index: {0}]
  %s3 = inlined_call_operand.vmem [shape: f32[1,4,1], index: 3, kind: output, shape index: {1}]
  %4 = xla_tuple %s2, %s3
  %s5 = sld [smem:[#allocation0]]
  $region65: #{tpu_custom_call.1} parent=0
    _
  %s7 = ssub.s32 1, %s5
  %s8 = scalar_select 0, %s7, %s5
  $region1: #{tpu_custom_call.1} parent=0
    #allocation2 [shape = 'u8[8192]{0}', space=vmem, size = 0x2000, scoped, tag = 'input window, operand 0']
    #allocation3 [shape = 's32[2]{0}', space=sflag, size = 0x8, scoped, tag = 'scoped memory for tpu_custom_call.1']
    #allocation4 [shape = 'u8[4096]{0}', space=vmem, size = 0x1000, scoped, tag = 'input window, operand 1, single buffered']
    #allocation5 [shape = 's32[1]{0}', space=sflag, size = 0x4, scoped, tag = 'scoped memory for tpu_custom_call.1']
    %9 = vsyncpa [#allocation3], 0
    %s10 = scalar_lea.sflag [#allocation3], 1
    %11 = vsyncpa %s10, 0
    %12 = vsyncpa [#allocation5], 0
    loop: start=0, step=1, limit=4
    $region2: #{tpu_custom_call.1} parent=1 // loop_pre_header
      _
    $region3: #{tpu_custom_call.1} parent=1 // loop_header
      %s14 = sphi 0, %s18
      %p15 = scmp.ge.s32.totalorder %s14, 4
      %s21 = sphi 0, %s33
      %s22 = sphi 0, %s29
      %s23 = sphi 0, %s21
      %s24 = sphi 0, %s22
      %s25 = sphi 0, %s23
      %s26 = sphi 0, %s24
      %s38 = sphi 0, %s40
      %s41 = sphi 0, %s38
      %s42 = sphi 0, %s41
      %s58 = sphi 0, %s42
      %s64 = sphi 0, %s66
      %s67 = sphi 0, %s64
      %s68 = sphi 0, %s67
      %s84 = sphi 0, %s68
      %s90 = sphi 0, %s92
      %s93 = sphi 0, %s90
      %s94 = sphi 0, %s93
      %s110 = sphi 0, %s94
      %s116 = sphi 0, %s118
      %s119 = sphi 0, %s116
      %s120 = sphi 0, %s119
      %s136 = sphi 0, %s120
    $region4: #{tpu_custom_call.1} parent=1 // loop_header_branch
      %17 = sbr.rel (%p15) target = $region8
    $region5: #{tpu_custom_call.1} parent=1 // loop_body
      %s19 = ssub.s32 %s14, 1
      %s20 = ssub.s32 %s14, 2
      %s27 = sadd.s32 1, %s22
      %p28 = scmp.ge.s32.totalorder %s27, 2
      %s29 = scalar_select %p28, 0, %s27
      %s30 = sadd.s32 1, %s21
      %s31 = scalar_select %p28, %s30, %s21
      %p32 = scmp.ge.s32.totalorder %s31, 1
      %s33 = scalar_select %p32, 0, %s31
      %s34 = ssub.s32 %s22, %s29
      %s35 = ssub.s32 %s21, %s33
      %s36 = sor.u32 %s34, %s35
      %p37 = scmp.eq.s32.totalorder %s36, 0
      %s39 = sadd.s32 %s38, 1
      %s40 = scalar_select %p37, %s38, %s39
      %p43 = pneg %p37
      %p44 = scmp.eq.s32.totalorder %s14, 1
      %p45 = por %p43, %p44
      %p46 = scmp.ne.s32.totalorder %s38, %s41
      %p47 = scmp.eq.s32.totalorder %s14, 0
      %p48 = por %p46, %p47
      %p49 = scmp.ne.s32.totalorder %s38, %s41
      %p50 = scmp.eq.s32.totalorder %s19, 1
      %p51 = por %p49, %p50
      %p52 = scmp.ne.s32.totalorder %s41, %s42
      %p53 = scmp.eq.s32.totalorder %s19, 0
      %p54 = por %p52, %p53
      %p55 = scmp.ne.s32.totalorder %s41, %s42
      %p56 = scmp.eq.s32.totalorder %s20, 1
      %p57 = por %p55, %p56
      %p59 = scmp.ne.s32.totalorder %s42, %s58
      %p60 = scmp.eq.s32.totalorder %s20, 0
      %p61 = por %p59, %p60
      %s62 = ssub.s32 %s21, %s33
      %p63 = scmp.eq.s32.totalorder %s62, 0
      %s65 = sadd.s32 %s64, 1
      %s66 = scalar_select %p63, %s64, %s65
      %p69 = pneg %p63
      %p70 = scmp.eq.s32.totalorder %s14, 1
      %p71 = por %p69, %p70
      %p72 = scmp.ne.s32.totalorder %s64, %s67
      %p73 = scmp.eq.s32.totalorder %s14, 0
      %p74 = por %p72, %p73
      %p75 = scmp.ne.s32.totalorder %s64, %s67
      %p76 = scmp.eq.s32.totalorder %s19, 1
      %p77 = por %p75, %p76
      %p78 = scmp.ne.s32.totalorder %s67, %s68
      %p79 = scmp.eq.s32.totalorder %s19, 0
      %p80 = por %p78, %p79
      %p81 = scmp.ne.s32.totalorder %s67, %s68
      %p82 = scmp.eq.s32.totalorder %s20, 1
      %p83 = por %p81, %p82
      %p85 = scmp.ne.s32.totalorder %s68, %s84
      %p86 = scmp.eq.s32.totalorder %s20, 0
      %p87 = por %p85, %p86
      %s88 = ssub.s32 %s21, %s33
      %p89 = scmp.eq.s32.totalorder %s88, 0
      %s91 = sadd.s32 %s90, 1
      %s92 = scalar_select %p89, %s90, %s91
      %p95 = pneg %p89
      %p96 = scmp.eq.s32.totalorder %s14, 1
      %p97 = por %p95, %p96
      %p98 = scmp.ne.s32.totalorder %s90, %s93
      %p99 = scmp.eq.s32.totalorder %s14, 0
      %p100 = por %p98, %p99
      %p101 = scmp.ne.s32.totalorder %s90, %s93
      %p102 = scmp.eq.s32.totalorder %s19, 1
      %p103 = por %p101, %p102
      %p104 = scmp.ne.s32.totalorder %s93, %s94
      %p105 = scmp.eq.s32.totalorder %s19, 0
      %p106 = por %p104, %p105
      %p107 = scmp.ne.s32.totalorder %s93, %s94
      %p108 = scmp.eq.s32.totalorder %s20, 1
      %p109 = por %p107, %p108
      %p111 = scmp.ne.s32.totalorder %s94, %s110
      %p112 = scmp.eq.s32.totalorder %s20, 0
      %p113 = por %p111, %p112
      %s114 = ssub.s32 %s21, %s33
      %p115 = scmp.eq.s32.totalorder %s114, 0
      %s117 = sadd.s32 %s116, 1
      %s118 = scalar_select %p115, %s116, %s117
      %p121 = pneg %p115
      %p122 = scmp.eq.s32.totalorder %s14, 1
      %p123 = por %p121, %p122
      %p124 = scmp.ne.s32.totalorder %s116, %s119
      %p125 = scmp.eq.s32.totalorder %s14, 0
      %p126 = por %p124, %p125
      %p127 = scmp.ne.s32.totalorder %s116, %s119
      %p128 = scmp.eq.s32.totalorder %s19, 1
      %p129 = por %p127, %p128
      %p130 = scmp.ne.s32.totalorder %s119, %s120
      %p131 = scmp.eq.s32.totalorder %s19, 0
      %p132 = por %p130, %p131
      %p133 = scmp.ne.s32.totalorder %s119, %s120
      %p134 = scmp.eq.s32.totalorder %s20, 1
      %p135 = por %p133, %p134
      %p137 = scmp.ne.s32.totalorder %s120, %s136
      %p138 = scmp.eq.s32.totalorder %s20, 0
      %p139 = por %p137, %p138
      %p140 = scmp.le.s32.totalorder 1, %s14
      %p141 = scmp.lt.s32.totalorder %s14, 3
      %p142 = pnand %p140, %p141
      %p143 = pneg %p142
      // Predicated region
      $region9: #{tpu_custom_call.1} parent=5 // pred_check
        _
      $region10: #{tpu_custom_call.1} parent=5 // pred_check_branch
        %145 = sbr.rel (%p142) target = $region12
      $region11: #{tpu_custom_call.1} parent=5 // pred_region
        %s146 = ssub.s32 %s14, 1
        // Predicated region
        $region13: #{tpu_custom_call.1} parent=11 // pred_check
          %p147 = pneg %p80
        $region14: #{tpu_custom_call.1} parent=11 // pred_check_branch
          %149 = sbr.rel (%p147) target = $region16
        $region15: #{tpu_custom_call.1} parent=11 // pred_region
          %s150 = smul.u32 2, %s23
          %s152 = ssub.s32 128, 128
          %153 = vsyncadd [#allocation5], %s152
          %s154 = smul.addr %s150, 64
          %s155 = scalar_lea.hbm %s1, %s154
          %s157 = sshll.u32 [#allocation4], 4
          %s158 = int_to_ptr.vmem [resolvable:$true] %s157
          %160 = dma.hbm_to_vmem [thread:$0]  %s155, 128, %s158, [#allocation5]
        $region16: #{tpu_custom_call.1} parent=11 // pred_fallthru
          _
      $region12: #{tpu_custom_call.1} parent=5 // pred_fallthru
        _
      %p161 = scmp.lt.s32.totalorder %s14, 2
      // Predicated region
      $region17: #{tpu_custom_call.1} parent=5 // pred_check
        %p162 = pneg %p161
      $region18: #{tpu_custom_call.1} parent=5 // pred_check_branch
        %164 = sbr.rel (%p162) target = $region20
      $region19: #{tpu_custom_call.1} parent=5 // pred_region
        // Predicated region
        $region21: #{tpu_custom_call.1} parent=19 // pred_check
          %p165 = pneg %p48
        $region22: #{tpu_custom_call.1} parent=19 // pred_check_branch
          %167 = sbr.rel (%p165) target = $region24
        $region23: #{tpu_custom_call.1} parent=19 // pred_region
          %s168 = sand.u32 %s38, 1
          %s169 = scalar_lea.sflag [#allocation3], %s168
          %s170 = sand.u32 %s38, 1
          %s171 = smul.addr %s170, 8
          %s172 = scalar_lea.vmem [#allocation2], %s171
          %s173 = smul.u32 2, %s21
          %s175 = ssub.s32 128, 128
          %176 = vsyncadd %s169, %s175
          %s177 = smul.addr %s22, 2
          %s178 = sadd.s32 %s173, %s177
          %s179 = smul.addr %s178, 64
          %s180 = scalar_lea.hbm %s0, %s179
          %s182 = sshll.u32 %s172, 4
          %s183 = int_to_ptr.vmem [resolvable:$true] %s182
          %185 = dma.hbm_to_vmem [thread:$0]  %s180, 128, %s183, %s169
        $region24: #{tpu_custom_call.1} parent=19 // pred_fallthru
          _
      $region20: #{tpu_custom_call.1} parent=5 // pred_fallthru
        _
      %p186 = scmp.le.s32.totalorder 1, %s14
      %p187 = scmp.lt.s32.totalorder %s14, 3
      %p188 = pnand %p186, %p187
      %p189 = pneg %p188
      // Predicated region
      $region25: #{tpu_custom_call.1} parent=5 // pred_check
        _
      $region26: #{tpu_custom_call.1} parent=5 // pred_check_branch
        %191 = sbr.rel (%p188) target = $region28
      $region27: #{tpu_custom_call.1} parent=5 // pred_region
        %s192 = ssub.s32 %s14, 1
        %s193 = sand.u32 %s41, 1
        %s194 = scalar_lea.sflag [#allocation3], %s193
        %s195 = sand.u32 %s41, 1
        %s196 = smul.addr %s195, 8
        %s197 = scalar_lea.vmem [#allocation2], %s196
        // Predicated region
        $region29: #{tpu_custom_call.1} parent=27 // pred_check
          %p198 = pneg %p54
        $region30: #{tpu_custom_call.1} parent=27 // pred_check_branch
          %200 = sbr.rel (%p198) target = $region32
        $region31: #{tpu_custom_call.1} parent=27 // pred_region
          %201 = dma.done %s194, 128
        $region32: #{tpu_custom_call.1} parent=27 // pred_fallthru
          _
        // Predicated region
        $region33: #{tpu_custom_call.1} parent=27 // pred_check
          %p202 = pneg %p80
        $region34: #{tpu_custom_call.1} parent=27 // pred_check_branch
          %204 = sbr.rel (%p202) target = $region36
        $region35: #{tpu_custom_call.1} parent=27 // pred_region
          %205 = dma.done [#allocation5], 128
        $region36: #{tpu_custom_call.1} parent=27 // pred_fallthru
          _
        %s206 = sand.u32 %s41, 1
        %s207 = scalar_lea.sflag [#allocation3], %s206
        %s208 = sand.u32 %s41, 1
        %s209 = smul.addr %s208, 8
        %s210 = scalar_lea.vmem [#allocation2], %s209
        %p211 = pneg %p54
        %p212 = pneg %p51
        %p213 = pneg %p80
        %p214 = pneg %p77
        %p215 = pneg %p106
        %p216 = pneg %p103
        %p217 = scmp.lt.s32.totalorder %s23, 0
        %s218 = scalar_select %p217, %s23, 0
        %s219 = smul.addr %s218, 4
        %s220 = scalar_lea.vmem %s2, %s219
        %p221 = pneg %p132
        %p222 = pneg %p129
        %p223 = scmp.lt.s32.totalorder %s23, 0
        %s224 = scalar_select %p223, %s23, 0
        %s225 = smul.addr %s224, 4
        %s226 = scalar_lea.vmem %s3, %s225
        %s227 = smul.u32 2, %s23
        %s228 = smul.u32 2, %s23
        %p229 = scmp.lt.s32.totalorder %s23, 0
        %s230 = scalar_select %p229, %s23, 0
        %s231 = smul.addr %s230, 4
        %s232 = scalar_lea.vmem %s2, %s231
        %p233 = scmp.lt.s32.totalorder %s23, 0
        %s234 = scalar_select %p233, %s23, 0
        %s235 = smul.addr %s234, 4
        %s236 = scalar_lea.vmem %s3, %s235
        %v237 = vld [vmem:[%s197] sm:$0xff]
        %v238 = vld [vmem:[#allocation4] sm:$0xff]
        %v239 = vadd.f32 %v237, %v238
        %v241 = vcombine.high %v239, %v239
        %vm243 = vcmask 1043456
        %v244 = vsel %vm243, %v239, 0.0
        %v245 = vsel %vm243, %v241, 0.0
        %v246 = vadd.f32 %v244, %v245
        %247 = vadd.xlane.f32.xlu0 %v246
        %v248 = vpop.xlane.xlu0 %247
        %v249 = vmul.f32 %v239, %v239
        %v251 = vcombine.high %v249, %v249
        %v253 = vsel %vm243, %v249, 0.0
        %v254 = vsel %vm243, %v251, 0.0
        %v255 = vadd.f32 %v253, %v254
        %256 = vadd.xlane.f32.xlu0 %v255
        %v257 = vpop.xlane.xlu0 %256
        %p258 = scmp.eq.s32.totalorder %s24, 0
        // Predicated region
        $region37: #{tpu_custom_call.1} parent=27 // pred_check
          %p259 = pneg %p258
        $region38: #{tpu_custom_call.1} parent=27 // pred_check_branch
          %261 = sbr.rel (%p259) target = $region40
        $region39: #{tpu_custom_call.1} parent=27 // pred_region
          %vm262 = vcmask 3072
          %263 = vst.msk [vmem:[%s232] sm:$0xf] %vm262, %v248
          %264 = vst.msk [vmem:[%s236] sm:$0xf] %vm262, %v257
        $region40: #{tpu_custom_call.1} parent=27 // pred_fallthru
          _
        %p265 = scmp.ne.s32.totalorder %s24, 0
        // Predicated region
        $region41: #{tpu_custom_call.1} parent=27 // pred_check
          %p266 = pneg %p265
        $region42: #{tpu_custom_call.1} parent=27 // pred_check_branch
          %268 = sbr.rel (%p266) target = $region44
        $region43: #{tpu_custom_call.1} parent=27 // pred_region
          %v269 = vld [vmem:[%s232] sm:$0xf]
          %v270 = vadd.f32 %v269, %v248
          %vm271 = vcmask 3072
          %272 = vst.msk [vmem:[%s232] sm:$0xf] %vm271, %v270
          %v273 = vld [vmem:[%s236] sm:$0xf]
          %v274 = vadd.f32 %v273, %v257
          %275 = vst.msk [vmem:[%s236] sm:$0xf] %vm271, %v274
        $region44: #{tpu_custom_call.1} parent=27 // pred_fallthru
          _
        %p276 = scmp.lt.s32.totalorder %s23, 0
        %s277 = scalar_select %p276, %s23, 0
        %s278 = smul.addr %s277, 4
        %s279 = scalar_lea.vmem %s2, %s278
        %p280 = scmp.lt.s32.totalorder %s23, 0
        %s281 = scalar_select %p280, %s23, 0
        %s282 = smul.addr %s281, 4
        %s283 = scalar_lea.vmem %s3, %s282
        // Predicated region
        $region45: #{tpu_custom_call.1} parent=27 // pred_check
          %p284 = pneg %p103
        $region46: #{tpu_custom_call.1} parent=27 // pred_check_branch
          %286 = sbr.rel (%p284) target = $region48
        $region47: #{tpu_custom_call.1} parent=27 // pred_region
          _
        $region48: #{tpu_custom_call.1} parent=27 // pred_fallthru
          _
        // Predicated region
        $region49: #{tpu_custom_call.1} parent=27 // pred_check
          %p287 = pneg %p129
        $region50: #{tpu_custom_call.1} parent=27 // pred_check_branch
          %289 = sbr.rel (%p287) target = $region52
        $region51: #{tpu_custom_call.1} parent=27 // pred_region
          _
        $region52: #{tpu_custom_call.1} parent=27 // pred_fallthru
          _
        // Predicated region
        $region53: #{tpu_custom_call.1} parent=27 // pred_check
          %p290 = pneg %p103
        $region54: #{tpu_custom_call.1} parent=27 // pred_check_branch
          %292 = sbr.rel (%p290) target = $region56
        $region55: #{tpu_custom_call.1} parent=27 // pred_region
          %p293 = scmp.lt.s32.totalorder %s23, 0
          %s294 = scalar_select %p293, %s23, 0
          %s295 = smul.addr %s294, 4
          %s296 = scalar_lea.vmem %s2, %s295
        $region56: #{tpu_custom_call.1} parent=27 // pred_fallthru
          _
        // Predicated region
        $region57: #{tpu_custom_call.1} parent=27 // pred_check
          %p297 = pneg %p129
        $region58: #{tpu_custom_call.1} parent=27 // pred_check_branch
          %299 = sbr.rel (%p297) target = $region60
        $region59: #{tpu_custom_call.1} parent=27 // pred_region
          %p300 = scmp.lt.s32.totalorder %s23, 0
          %s301 = scalar_select %p300, %s23, 0
          %s302 = smul.addr %s301, 4
          %s303 = scalar_lea.vmem %s3, %s302
        $region60: #{tpu_custom_call.1} parent=27 // pred_fallthru
          _
      $region28: #{tpu_custom_call.1} parent=5 // pred_fallthru
        _
      %p304 = scmp.le.s32.totalorder 2, %s14
      // Predicated region
      $region61: #{tpu_custom_call.1} parent=5 // pred_check
        %p305 = pneg %p304
      $region62: #{tpu_custom_call.1} parent=5 // pred_check_branch
        %307 = sbr.rel (%p305) target = $region64
      $region63: #{tpu_custom_call.1} parent=5 // pred_region
        %s308 = ssub.s32 %s14, 2
      $region64: #{tpu_custom_call.1} parent=5 // pred_fallthru
        _
    $region6: #{tpu_custom_call.1} parent=1 // loop_footer
      %s18 = sadd.s32 1, %s14
    $region7: #{tpu_custom_call.1} parent=1 // loop_footer_branch
      %13 = sbr.rel target = $region3
    $region8: #{tpu_custom_call.1} parent=1 // loop_exit
      _
    %309 = vsyncpa [#allocation3], 1
    %s310 = scalar_lea.sflag [#allocation3], 1
    %311 = vsyncpa %s310, 1
    %312 = vsyncpa [#allocation5], 1

</llo_original>
